<compile_context>
chip_gen: v5e
topology: v5e:2x2
jax: 0.10.0
libtpu: 0.0.40
codegen_flags: <defaults>
</compile_context>

<pallas_src>
import functools

import jax
import jax.numpy as jnp
from jax.experimental import pallas as pl
from jax.experimental.pallas import tpu as pltpu

_LANE = 128     # vreg lane width (last dim)
_SUBLANE = 8    # f32 sublane count (second-to-last dim)

_HAS_BUFFERED = hasattr(pl, "Buffered")


def _round_up(x, m):
    return ((x + m - 1) // m) * m


def _choose_batch_tile(batch, tb_max=512):
    """Single grid step for small batches; balanced multiple-of-8 tiles above
    tb_max so per-tile padding waste is at most 7 rows."""
    b8 = _round_up(max(int(batch), 1), _SUBLANE)
    if b8 <= tb_max:
        return b8
    n_tiles = -(-b8 // tb_max)                       # cdiv
    return _round_up(-(-b8 // n_tiles), _SUBLANE)


def _resident_spec(shape):
    """BlockSpec for a grid-invariant operand (constant index map).

    Single-buffered when pipeline_mode=pl.Buffered(1) is available — default
    pipelining would allocate two VMEM copies of weights that never change.
    """
    index_map = lambda i: (0,) * len(shape)
    if _HAS_BUFFERED:
        try:
            return pl.BlockSpec(shape, index_map, pipeline_mode=pl.Buffered(1))
        except TypeError:
            pass
    return pl.BlockSpec(shape, index_map)


def _ffnn_kernel(x_ref, w1_ref, b1_ref, w2_ref, b2_ref, o_ref):
    # Layer 1: bf16 operands on the MXU, f32 accumulation.
    h = jnp.dot(x_ref[...], w1_ref[...], preferred_element_type=jnp.float32)
    # Epilogue in f32 (bias add + ReLU) — v5e VPU/EUP have no bf16 path.
    h = jnp.maximum(h + b1_ref[...], 0.0)
    # Layer 2: cast the activation back to bf16 for the MXU.
    y = jnp.dot(h.astype(w2_ref.dtype), w2_ref[...],
                preferred_element_type=jnp.float32)
    y = y + b2_ref[...]
    # Clamp so exp(-y) stays finite before the approximate EUP reciprocal.
    y = jnp.clip(y, -60.0, 60.0)
    # Sigmoid: exp and the (approx) reciprocal both ride the EUP slot.
    sig = pl.reciprocal(1.0 + jnp.exp(-y), approx=True)
    o_ref[...] = sig.astype(o_ref.dtype)


def prepare_params(w1, b1, w2, b2):
    """One-time weight prep (hoisted out of the forward pass):
    pad feature dims to lane multiples and cast MXU operands to bf16."""
    vec_dim, hidden = w1.shape
    num_classes = w2.shape[1]
    f_pad = _round_up(vec_dim, _LANE)
    h_pad = _round_up(hidden, _LANE)
    c_pad = _round_up(num_classes, _LANE)

    w1_p = jnp.zeros((f_pad, h_pad), jnp.bfloat16).at[:vec_dim, :hidden].set(
        w1.astype(jnp.bfloat16))
    w2_p = jnp.zeros((h_pad, c_pad), jnp.bfloat16).at[:hidden, :num_classes].set(
        w2.astype(jnp.bfloat16))
    b1_p = jnp.zeros((1, h_pad), jnp.float32).at[0, :hidden].set(
        b1.astype(jnp.float32))
    b2_p = jnp.zeros((1, c_pad), jnp.float32).at[0, :num_classes].set(
        b2.astype(jnp.float32))
    return {"w1": w1_p, "b1": b1_p, "w2": w2_p, "b2": b2_p,
            "num_classes": int(num_classes)}


@functools.partial(jax.jit, static_argnames=("num_classes", "tb_max"))
def ffnn_forward_prepared(x, w1_p, b1_p, w2_p, b2_p, *, num_classes, tb_max=512):
    """Fused MLP forward pass on pre-padded bf16 weights.

    x   : (B, vec_dim) f32
    w1_p: (f_pad, h_pad) bf16      b1_p: (1, h_pad) f32
    w2_p: (h_pad, c_pad) bf16      b2_p: (1, c_pad) f32
    returns (B, num_classes) f32 sigmoid probabilities.
    """
    B, vec_dim = x.shape
    f_pad, h_pad = w1_p.shape
    c_pad = w2_p.shape[1]

    tb = _choose_batch_tile(B, tb_max)
    grid = (pl.cdiv(B, tb),)

    # Only the feature dim is padded; the batch stays as-is (the partial last
    # block's extra rows are computed but their writes are masked).
    x_b = x.astype(jnp.bfloat16)
    x_p = x_b if f_pad == vec_dim else jnp.pad(x_b, ((0, 0), (0, f_pad - vec_dim)))

    # VMEM budget: double-buffered x/out tiles + (single-buffered) weights.
    w_buf = 1 if _HAS_BUFFERED else 2
    weight_bytes = (f_pad * h_pad + h_pad * c_pad) * 2 + (h_pad + c_pad) * 4
    vmem_est = 2 * tb * f_pad * 2 + 2 * tb * c_pad * 4 + w_buf * weight_bytes

    ckw = dict(dimension_semantics=("parallel",))
    if vmem_est > 32 * 1024 * 1024:
        try:
            cap = int(pltpu.get_tpu_info().vmem_capacity_bytes)
        except Exception:
            cap = 64 * 1024 * 1024  # v7x per-TC physical VMEM (smallest)
        ckw["vmem_limit_bytes"] = max(
            vmem_est, min(int(vmem_est * 5 // 4), cap - 2 * 1024 * 1024))
        # TODO(synk): if the resident weights alone approach the v7x 64 MiB
        # budget, add an 'arbitrary' grid axis over h_pad with an f32 VMEM
        # accumulator + pl.when epilogue instead of full-weight residency.

    cost = pl.CostEstimate(
        flops=2 * B * (f_pad * h_pad + h_pad * c_pad),
        transcendentals=2 * B * c_pad,
        bytes_accessed=B * f_pad * 2 + B * c_pad * 4 + weight_bytes,
    )

    out_p = pl.pallas_call(
        _ffnn_kernel,
        out_shape=jax.ShapeDtypeStruct((B, c_pad), jnp.float32),
        grid_spec=pltpu.PrefetchScalarGridSpec(
            num_scalar_prefetch=0,
            grid=grid,
            in_specs=[
                pl.BlockSpec((tb, f_pad), lambda i: (i, 0)),   # x tile
                _resident_spec((f_pad, h_pad)),                # W1 (resident)
                _resident_spec((1, h_pad)),                    # b1
                _resident_spec((h_pad, c_pad)),                # W2 (resident)
                _resident_spec((1, c_pad)),                    # b2
            ],
            out_specs=pl.BlockSpec((tb, c_pad), lambda i: (i, 0)),  # lane-dense
        ),
        compiler_params=pltpu.CompilerParams(**ckw),
        cost_estimate=cost,
    )(x_p, w1_p, b1_p, w2_p, b2_p)

    return out_p[:, :num_classes]


def cross_entropy_loss(logits, labels):
    # PyTorch nn.CrossEntropyLoss: log_softmax + NLL, mean over batch.
    # Applied to the sigmoid output, exactly as the reference forward does.
    lse = jax.nn.logsumexp(logits, axis=-1, keepdims=True)
    log_probs = logits - lse
    picked = jnp.take_along_axis(log_probs, labels[:, None], axis=-1)[:, 0]
    return -jnp.mean(picked)


def feedforward_nn(word, prepared, labels=None):
    """Mirrors FeedForwardNN.forward(word, labels)."""
    probs = ffnn_forward_prepared(
        word, prepared["w1"], prepared["b1"], prepared["w2"], prepared["b2"],
        num_classes=prepared["num_classes"])
    if labels is None:
        return probs, None
    return probs, cross_entropy_loss(probs, labels)


def init_params(key, vec_dim, num_classes, hidden_dim):
    # Deterministic init mimicking nn.Linear: U(-1/sqrt(fan_in), 1/sqrt(fan_in)).
    k1, k2, k3, k4 = jax.random.split(key, 4)
    lim1 = 1.0 / jnp.sqrt(vec_dim)
    lim2 = 1.0 / jnp.sqrt(hidden_dim)
    return {
        "w1": jax.random.uniform(k1, (vec_dim, hidden_dim), jnp.float32, -lim1, lim1),
        "b1": jax.random.uniform(k2, (hidden_dim,), jnp.float32, -lim1, lim1),
        "w2": jax.random.uniform(k3, (hidden_dim, num_classes), jnp.float32, -lim2, lim2),
        "b2": jax.random.uniform(k4, (num_classes,), jnp.float32, -lim2, lim2),
    }


if __name__ == "__main__":
    key = jax.random.PRNGKey(0)
    k_x, k_p, k_l = jax.random.split(key, 3)

    # Small shapes consistent with the module (non-multiples exercise padding):
    B, vec_dim, hidden_dim, num_classes = 10, 32, 100, 4
    word = jax.random.normal(k_x, (B, vec_dim), jnp.float32)
    labels = jax.random.randint(k_l, (B,), 0, num_classes)
    params = init_params(k_p, vec_dim, num_classes, hidden_dim)

    # One-time param prep (padding + bf16 cast hoisted out of the forward).
    prepared = prepare_params(params["w1"], params["b1"],
                              params["w2"], params["b2"])

    # Inference path (labels=None)
    probs, _ = feedforward_nn(word, prepared, labels=None)
    probs = jax.block_until_ready(probs)

    # Training path (with labels -> loss)
    probs2, loss = feedforward_nn(word, prepared, labels=labels)
    loss = jax.block_until_ready(loss)

    # Reference with the same bf16 matmul operands / f32 accumulation.
    w1_b = params["w1"].astype(jnp.bfloat16)
    w2_b = params["w2"].astype(jnp.bfloat16)
    h_ref = jnp.maximum(
        jnp.dot(word.astype(jnp.bfloat16), w1_b,
                preferred_element_type=jnp.float32) + params["b1"], 0.0)
    ref_bf16 = jax.nn.sigmoid(
        jnp.dot(h_ref.astype(jnp.bfloat16), w2_b,
                preferred_element_type=jnp.float32) + params["b2"])
    # Approx EUP reciprocal in the sigmoid -> compare probabilities at ~3e-3.
    assert jnp.allclose(probs, ref_bf16, atol=3e-3, rtol=3e-3), "mismatch vs bf16 ref"

    # Loose sanity check against the full-f32 reference.
    h32 = jnp.maximum(word @ params["w1"] + params["b1"], 0.0)
    ref_f32 = jax.nn.sigmoid(h32 @ params["w2"] + params["b2"])
    assert jnp.allclose(probs, ref_f32, atol=3e-2), "mismatch vs f32 ref"

    assert probs.shape == (B, num_classes)
    assert loss.shape == ()
    assert bool(jnp.isfinite(loss))

    print("KERNEL_OK")
</pallas_src>

<mosaic_0001>
module attributes {stable_mosaic.version = 11 : i64} {
  func.func @_ffnn_kernel(%arg0: i32, %arg1: memref<16x128xbf16, #tpu.memory_space<vmem>>, %arg2: memref<128x128xbf16, #tpu.memory_space<vmem>>, %arg3: memref<1x128xf32, #tpu.memory_space<vmem>>, %arg4: memref<128x128xbf16, #tpu.memory_space<vmem>>, %arg5: memref<1x128xf32, #tpu.memory_space<vmem>>, %arg6: memref<16x128xf32, #tpu.memory_space<vmem>>) attributes {dimension_semantics = [#tpu.dimension_semantics<parallel>], iteration_bounds = array<i64: 1>, scalar_prefetch = 0 : i64, scratch_operands = 0 : i64, tpu.core_type = #tpu.core_type<tc>, window_params = [{transform_indices = @transform_0, window_bounds = array<i64: 16, 128>}, {pipeline_mode = #tpu.pipeline_mode<synchronous>, transform_indices = @transform_1, window_bounds = array<i64: 128, 128>}, {pipeline_mode = #tpu.pipeline_mode<synchronous>, transform_indices = @transform_2, window_bounds = array<i64: 1, 128>}, {pipeline_mode = #tpu.pipeline_mode<synchronous>, transform_indices = @transform_3, window_bounds = array<i64: 128, 128>}, {pipeline_mode = #tpu.pipeline_mode<synchronous>, transform_indices = @transform_4, window_bounds = array<i64: 1, 128>}, {transform_indices = @transform_5, window_bounds = array<i64: 16, 128>}]} {
    %c0 = arith.constant 0 : index
    %c0_0 = arith.constant 0 : index
    %0 = vector.load %arg1[%c0, %c0_0] : memref<16x128xbf16, #tpu.memory_space<vmem>>, vector<16x128xbf16>
    %c0_1 = arith.constant 0 : index
    %c0_2 = arith.constant 0 : index
    %1 = vector.load %arg2[%c0_1, %c0_2] : memref<128x128xbf16, #tpu.memory_space<vmem>>, vector<128x128xbf16>
    %cst = arith.constant dense<0.000000e+00> : vector<16x128xf32>
    %2 = tpu.matmul %0, %1, %cst {dimension_numbers = #tpu.dot_dimension_numbers<[1], [0], [0], [1], [0, 0, 1, 1], [], []>} : vector<16x128xbf16>, vector<128x128xbf16>, vector<16x128xf32> -> vector<16x128xf32>
    %c0_3 = arith.constant 0 : index
    %c0_4 = arith.constant 0 : index
    %3 = vector.load %arg3[%c0_3, %c0_4] : memref<1x128xf32, #tpu.memory_space<vmem>>, vector<1x128xf32>
    %4 = vector.broadcast %3 : vector<1x128xf32> to vector<16x128xf32>
    %5 = arith.addf %2, %4 : vector<16x128xf32>
    %cst_5 = arith.constant 0.000000e+00 : f32
    %6 = vector.broadcast %cst_5 : f32 to vector<16x128xf32>
    %7 = arith.maximumf %5, %6 : vector<16x128xf32>
    %8 = arith.truncf %7 : vector<16x128xf32> to vector<16x128xbf16>
    %c0_6 = arith.constant 0 : index
    %c0_7 = arith.constant 0 : index
    %9 = vector.load %arg4[%c0_6, %c0_7] : memref<128x128xbf16, #tpu.memory_space<vmem>>, vector<128x128xbf16>
    %cst_8 = arith.constant dense<0.000000e+00> : vector<16x128xf32>
    %10 = tpu.matmul %8, %9, %cst_8 {dimension_numbers = #tpu.dot_dimension_numbers<[1], [0], [0], [1], [0, 0, 1, 1], [], []>} : vector<16x128xbf16>, vector<128x128xbf16>, vector<16x128xf32> -> vector<16x128xf32>
    %c0_9 = arith.constant 0 : index
    %c0_10 = arith.constant 0 : index
    %11 = vector.load %arg5[%c0_9, %c0_10] : memref<1x128xf32, #tpu.memory_space<vmem>>, vector<1x128xf32>
    %12 = vector.broadcast %11 : vector<1x128xf32> to vector<16x128xf32>
    %13 = arith.addf %10, %12 : vector<16x128xf32>
    %cst_11 = arith.constant -6.000000e+01 : f32
    %cst_12 = arith.constant 6.000000e+01 : f32
    %14 = vector.broadcast %cst_11 : f32 to vector<16x128xf32>
    %15 = arith.maximumf %14, %13 : vector<16x128xf32>
    %16 = vector.broadcast %cst_12 : f32 to vector<16x128xf32>
    %17 = arith.minimumf %16, %15 : vector<16x128xf32>
    %cst_13 = arith.constant 0.000000e+00 : f32
    %18 = vector.broadcast %cst_13 : f32 to vector<16x128xf32>
    %19 = arith.subf %18, %17 : vector<16x128xf32>
    %20 = math.exp %19 : vector<16x128xf32>
    %cst_14 = arith.constant 1.000000e+00 : f32
    %21 = vector.broadcast %cst_14 : f32 to vector<16x128xf32>
    %22 = arith.addf %21, %20 : vector<16x128xf32>
    %23 = tpu.reciprocal %22 {approx = true} : vector<16x128xf32> -> vector<16x128xf32>
    %c0_15 = arith.constant 0 : index
    %c0_16 = arith.constant 0 : index
    %24 = vector.load %arg6[%c0_15, %c0_16] : memref<16x128xf32, #tpu.memory_space<vmem>>, vector<16x128xf32>
    tpu.vector_store %arg6[%c0_15, %c0_16], %23 {strides = array<i32>} : memref<16x128xf32, #tpu.memory_space<vmem>>, vector<16x128xf32>,
    return
  }
  func.func @transform_0(%arg0: i32) -> (i32, i32) {
    %c0_i32 = arith.constant 0 : i32
    %c0_i32_0 = arith.constant 0 : i32
    return %arg0, %c0_i32 : i32, i32
  }
  func.func @transform_1(%arg0: i32) -> (i32, i32) {
    %c0_i32 = arith.constant 0 : i32
    %c0_i32_0 = arith.constant 0 : i32
    %c0_i32_1 = arith.constant 0 : i32
    return %c0_i32, %c0_i32_0 : i32, i32
  }
  func.func @transform_2(%arg0: i32) -> (i32, i32) {
    %c0_i32 = arith.constant 0 : i32
    %c0_i32_0 = arith.constant 0 : i32
    %c0_i32_1 = arith.constant 0 : i32
    return %c0_i32, %c0_i32_0 : i32, i32
  }
  func.func @transform_3(%arg0: i32) -> (i32, i32) {
    %c0_i32 = arith.constant 0 : i32
    %c0_i32_0 = arith.constant 0 : i32
    %c0_i32_1 = arith.constant 0 : i32
    return %c0_i32, %c0_i32_0 : i32, i32
  }
  func.func @transform_4(%arg0: i32) -> (i32, i32) {
    %c0_i32 = arith.constant 0 : i32
    %c0_i32_0 = arith.constant 0 : i32
    %c0_i32_1 = arith.constant 0 : i32
    return %c0_i32, %c0_i32_0 : i32, i32
  }
  func.func @transform_5(%arg0: i32) -> (i32, i32) {
    %c0_i32 = arith.constant 0 : i32
    %c0_i32_0 = arith.constant 0 : i32
    return %arg0, %c0_i32 : i32, i32
  }
}

</mosaic_0001>

<llo_original>
// kernel: ffnn_forward_prepared.1
$region0: #{ffnn_forward_prepared.1}
  #allocation0 [shape = 'u32[]', space=smem, size = 0x4, offset = 0x4, fixed_abs, tag = 'smem constant byte address 0x4 - core index']
  #allocation1 [shape = 'u32[72,128]{1,0:T(1,128)}', space=vmem, size = 0x9000, scoped, tag = 'internal scratch']
  %s0 = inlined_call_operand.vmem [shape: bf16[10,128], index: 0, kind: input, shape index: {}]
  %s1 = inlined_call_operand.hbm [shape: bf16[128,128], index: 1, kind: input, shape index: {}]
  %s2 = inlined_call_operand.vmem [shape: f32[1,128], index: 2, kind: input, shape index: {}]
  %s3 = inlined_call_operand.hbm [shape: bf16[128,128], index: 3, kind: input, shape index: {}]
  %s4 = inlined_call_operand.vmem [shape: f32[1,128], index: 4, kind: input, shape index: {}]
  %s5 = inlined_call_operand.vmem [shape: f32[10,128], index: 5, kind: output, shape index: {}]
  %s6 = sld [smem:[#allocation0]]
  $region38: #{ffnn_forward_prepared.1} parent=0
    _
  %s8 = ssub.s32 1, %s6
  %s9 = scalar_select 0, %s8, %s6
  $region1: #{ffnn_forward_prepared.1} parent=0
    #allocation2 [shape = 'u8[32768]{0}', space=vmem, size = 0x8000, scoped, tag = 'input window, operand 1, single buffered']
    #allocation3 [shape = 's32[1]{0}', space=sflag, size = 0x4, scoped, tag = 'scoped memory for ffnn_forward_prepared.1']
    #allocation4 [shape = 'u8[32768]{0}', space=vmem, size = 0x8000, scoped, tag = 'input window, operand 3, single buffered']
    #allocation5 [shape = 's32[1]{0}', space=sflag, size = 0x4, scoped, tag = 'scoped memory for ffnn_forward_prepared.1']
    %10 = vsyncpa [#allocation3], 0
    %11 = vsyncpa [#allocation5], 0
    // Predicated region
    $region2: #{ffnn_forward_prepared.1} parent=1 // pred_check
      _
    $region3: #{ffnn_forward_prepared.1} parent=1 // pred_check_branch
      %13 = sbr.rel (0) target = $region5
    $region4: #{ffnn_forward_prepared.1} parent=1 // pred_region
      _
    $region5: #{ffnn_forward_prepared.1} parent=1 // pred_fallthru
      _
    // Predicated region
    $region6: #{ffnn_forward_prepared.1} parent=1 // pred_check
      _
    $region7: #{ffnn_forward_prepared.1} parent=1 // pred_check_branch
      %15 = sbr.rel (0) target = $region9
    $region8: #{ffnn_forward_prepared.1} parent=1 // pred_region
      %17 = vsyncadd [#allocation3], 0
      %s18 = sshll.u32 %s1, 4
      %s19 = int_to_ptr.hbm [resolvable:$true] %s18
      %s20 = sshll.u32 [#allocation2], 4
      %s21 = int_to_ptr.vmem [resolvable:$true] %s20
      %26 = dma.hbm_to_vmem [thread:$0]  %s19, 1024, %s21, [#allocation3], 64, 64, 4
    $region9: #{ffnn_forward_prepared.1} parent=1 // pred_fallthru
      _
    // Predicated region
    $region10: #{ffnn_forward_prepared.1} parent=1 // pred_check
      _
    $region11: #{ffnn_forward_prepared.1} parent=1 // pred_check_branch
      %28 = sbr.rel (0) target = $region13
    $region12: #{ffnn_forward_prepared.1} parent=1 // pred_region
      _
    $region13: #{ffnn_forward_prepared.1} parent=1 // pred_fallthru
      _
    // Predicated region
    $region14: #{ffnn_forward_prepared.1} parent=1 // pred_check
      _
    $region15: #{ffnn_forward_prepared.1} parent=1 // pred_check_branch
      %30 = sbr.rel (0) target = $region17
    $region16: #{ffnn_forward_prepared.1} parent=1 // pred_region
      %32 = vsyncadd [#allocation5], 0
      %s33 = sshll.u32 %s3, 4
      %s34 = int_to_ptr.hbm [resolvable:$true] %s33
      %s35 = sshll.u32 [#allocation4], 4
      %s36 = int_to_ptr.vmem [resolvable:$true] %s35
      %41 = dma.hbm_to_vmem [thread:$0]  %s34, 1024, %s36, [#allocation5], 64, 64, 4
    $region17: #{ffnn_forward_prepared.1} parent=1 // pred_fallthru
      _
    // Predicated region
    $region18: #{ffnn_forward_prepared.1} parent=1 // pred_check
      _
    $region19: #{ffnn_forward_prepared.1} parent=1 // pred_check_branch
      %43 = sbr.rel (0) target = $region21
    $region20: #{ffnn_forward_prepared.1} parent=1 // pred_region
      _
    $region21: #{ffnn_forward_prepared.1} parent=1 // pred_fallthru
      _
    // Predicated region
    $region22: #{ffnn_forward_prepared.1} parent=1 // pred_check
      _
    $region23: #{ffnn_forward_prepared.1} parent=1 // pred_check_branch
      %45 = sbr.rel (0) target = $region25
    $region24: #{ffnn_forward_prepared.1} parent=1 // pred_region
      %47 = dma.done [#allocation3], 1024
    $region25: #{ffnn_forward_prepared.1} parent=1 // pred_fallthru
      _
    // Predicated region
    $region26: #{ffnn_forward_prepared.1} parent=1 // pred_check
      _
    $region27: #{ffnn_forward_prepared.1} parent=1 // pred_check_branch
      %49 = sbr.rel (0) target = $region29
    $region28: #{ffnn_forward_prepared.1} parent=1 // pred_region
      %51 = dma.done [#allocation5], 1024
    $region29: #{ffnn_forward_prepared.1} parent=1 // pred_fallthru
      _
    %v52 = vld [vmem:[%s0] sm:$0xf]
    %v53 = vld [vmem:[%s0 + $0x4] sm:$0xf]
    %v54 = vld [vmem:[#allocation2] sm:$0xf]
    %v55 = vld [vmem:[#allocation2 + $0x4] sm:$0xf]
    %v56 = vld [vmem:[#allocation2 + $0x8] sm:$0xf]
    %v57 = vld [vmem:[#allocation2 + $0xc] sm:$0xf]
    %v58 = vld [vmem:[#allocation2 + $0x10] sm:$0xf]
    %v59 = vld [vmem:[#allocation2 + $0x14] sm:$0xf]
    %v60 = vld [vmem:[#allocation2 + $0x18] sm:$0xf]
    %v61 = vld [vmem:[#allocation2 + $0x1c] sm:$0xf]
    %v62 = vld [vmem:[#allocation2 + $0x20] sm:$0xf]
    %v63 = vld [vmem:[#allocation2 + $0x24] sm:$0xf]
    %v64 = vld [vmem:[#allocation2 + $0x28] sm:$0xf]
    %v65 = vld [vmem:[#allocation2 + $0x2c] sm:$0xf]
    %v66 = vld [vmem:[#allocation2 + $0x30] sm:$0xf]
    %v67 = vld [vmem:[#allocation2 + $0x34] sm:$0xf]
    %v68 = vld [vmem:[#allocation2 + $0x38] sm:$0xf]
    %v69 = vld [vmem:[#allocation2 + $0x3c] sm:$0xf]
    %v70 = vld [vmem:[%s2] sm:$0x1]
    %v72 = vperm.slane %v70, 0
    %v76 = vunpack.c.l.b16 %v52
    %v77 = vunpack.c.l.b16 %v53
    %v78 = vpack.c.b16 %v77, %v76
    %v96 = vunpack.c.l.b16 %v54
    %v97 = vunpack.c.l.b16 %v55
    %v98 = vunpack.c.l.b16 %v56
    %v99 = vunpack.c.l.b16 %v57
    %v100 = vunpack.c.l.b16 %v58
    %v101 = vunpack.c.l.b16 %v59
    %v102 = vunpack.c.l.b16 %v60
    %v103 = vunpack.c.l.b16 %v61
    %v104 = vunpack.c.l.b16 %v62
    %v105 = vunpack.c.l.b16 %v63
    %v106 = vunpack.c.l.b16 %v64
    %v107 = vunpack.c.l.b16 %v65
    %v108 = vunpack.c.l.b16 %v66
    %v109 = vunpack.c.l.b16 %v67
    %v110 = vunpack.c.l.b16 %v68
    %v111 = vunpack.c.l.b16 %v69
    %v112 = vpack.c.b16 %v97, %v96
    %v113 = vpack.c.b16 %v99, %v98
    %v114 = vpack.c.b16 %v101, %v100
    %v115 = vpack.c.b16 %v103, %v102
    %v116 = vpack.c.b16 %v105, %v104
    %v117 = vpack.c.b16 %v107, %v106
    %v118 = vpack.c.b16 %v109, %v108
    %v119 = vpack.c.b16 %v111, %v110
    %128 = vmatpush.bf16.msra.mxu0 %v119
    %129 = vmatpush.bf16.msra.mxu0 %v118
    %130 = vmatpush.bf16.msra.mxu0 %v117
    %131 = vmatpush.bf16.msra.mxu0 %v116
    %132 = vmatpush.bf16.msra.mxu0 %v115
    %133 = vmatpush.bf16.msra.mxu0 %v114
    %134 = vmatpush.bf16.msra.mxu0 %v113
    %135 = vmatpush.bf16.msra.mxu0 %v112
    %136 = vmatmul.bf16.gmra.mxu0 %v78
    %v137 = vpop.f32.mrf.mxu0
    %v138 = vadd.f32 %v72, %v137
    %v139 = vpop.f32.mrf.mxu0
    %v140 = vadd.f32 %v72, %v139
    %141 = vdwg.mxu0
    %v142 = vmax.f32 %v138, 0.0
    %v143 = vmax.f32 %v140, 0.0
    %v144 = vpack.c.bf16 %v143, %v142
    %v145 = vld [vmem:[#allocation4] sm:$0xf]
    %v146 = vld [vmem:[#allocation4 + $0x4] sm:$0xf]
    %v147 = vld [vmem:[#allocation4 + $0x8] sm:$0xf]
    %v148 = vld [vmem:[#allocation4 + $0xc] sm:$0xf]
    %v149 = vld [vmem:[#allocation4 + $0x10] sm:$0xf]
    %v150 = vld [vmem:[#allocation4 + $0x14] sm:$0xf]
    %v151 = vld [vmem:[#allocation4 + $0x18] sm:$0xf]
    %v152 = vld [vmem:[#allocation4 + $0x1c] sm:$0xf]
    %v153 = vld [vmem:[#allocation4 + $0x20] sm:$0xf]
    %v154 = vld [vmem:[#allocation4 + $0x24] sm:$0xf]
    %v155 = vld [vmem:[#allocation4 + $0x28] sm:$0xf]
    %v156 = vld [vmem:[#allocation4 + $0x2c] sm:$0xf]
    %v157 = vld [vmem:[#allocation4 + $0x30] sm:$0xf]
    %v158 = vld [vmem:[#allocation4 + $0x34] sm:$0xf]
    %v159 = vld [vmem:[#allocation4 + $0x38] sm:$0xf]
    %v160 = vld [vmem:[#allocation4 + $0x3c] sm:$0xf]
    %v161 = vld [vmem:[%s4] sm:$0x1]
    %v163 = vperm.slane %v161, 0
    %v181 = vunpack.c.l.b16 %v145
    %v182 = vunpack.c.l.b16 %v146
    %v183 = vunpack.c.l.b16 %v147
    %v184 = vunpack.c.l.b16 %v148
    %v185 = vunpack.c.l.b16 %v149
    %v186 = vunpack.c.l.b16 %v150
    %v187 = vunpack.c.l.b16 %v151
    %v188 = vunpack.c.l.b16 %v152
    %v189 = vunpack.c.l.b16 %v153
    %v190 = vunpack.c.l.b16 %v154
    %v191 = vunpack.c.l.b16 %v155
    %v192 = vunpack.c.l.b16 %v156
    %v193 = vunpack.c.l.b16 %v157
    %v194 = vunpack.c.l.b16 %v158
    %v195 = vunpack.c.l.b16 %v159
    %v196 = vunpack.c.l.b16 %v160
    %v197 = vpack.c.b16 %v182, %v181
    %v198 = vpack.c.b16 %v184, %v183
    %v199 = vpack.c.b16 %v186, %v185
    %v200 = vpack.c.b16 %v188, %v187
    %v201 = vpack.c.b16 %v190, %v189
    %v202 = vpack.c.b16 %v192, %v191
    %v203 = vpack.c.b16 %v194, %v193
    %v204 = vpack.c.b16 %v196, %v195
    %213 = vmatpush.bf16.msra.mxu0 %v204
    %214 = vmatpush.bf16.msra.mxu0 %v203
    %215 = vmatpush.bf16.msra.mxu0 %v202
    %216 = vmatpush.bf16.msra.mxu0 %v201
    %217 = vmatpush.bf16.msra.mxu0 %v200
    %218 = vmatpush.bf16.msra.mxu0 %v199
    %219 = vmatpush.bf16.msra.mxu0 %v198
    %220 = vmatpush.bf16.msra.mxu0 %v197
    %221 = vmatmul.bf16.gmra.mxu0 %v144
    %v222 = vpop.f32.mrf.mxu0
    %v223 = vadd.f32 %v163, %v222
    %v224 = vpop.f32.mrf.mxu0
    %v225 = vadd.f32 %v163, %v224
    %226 = vdwg.mxu0
    %v227 = vmax.f32 %v223, -60.0
    %v228 = vmax.f32 %v225, -60.0
    %v229 = vmin.f32 %v227, 60.0
    %v230 = vmin.f32 %v228, 60.0
    %v231 = vsub.f32 0.0, %v229
    %v232 = vsub.f32 0.0, %v230
    %v233 = vmul.f32 %v231, 1.442695
    %v234 = vpow.pop %v233
    %v235 = vmul.f32 %v232, 1.442695
    %v236 = vpow.pop %v235
    %v237 = vadd.f32 %v234, 1.0
    %v238 = vadd.f32 %v236, 1.0
    %v239 = vrcp.pop %v237
    %v240 = vrcp.pop %v238
    %241 = vst [vmem:[%s5] sm:$0xff] %v239
    %242 = vst [vmem:[%s5 + $0x8] sm:$0xff] %v240
    // Predicated region
    $region30: #{ffnn_forward_prepared.1} parent=1 // pred_check
      _
    $region31: #{ffnn_forward_prepared.1} parent=1 // pred_check_branch
      %244 = sbr.rel (0) target = $region33
    $region32: #{ffnn_forward_prepared.1} parent=1 // pred_region
      _
    $region33: #{ffnn_forward_prepared.1} parent=1 // pred_fallthru
      _
    // Predicated region
    $region34: #{ffnn_forward_prepared.1} parent=1 // pred_check
      _
    $region35: #{ffnn_forward_prepared.1} parent=1 // pred_check_branch
      %246 = sbr.rel (0) target = $region37
    $region36: #{ffnn_forward_prepared.1} parent=1 // pred_region
      _
    $region37: #{ffnn_forward_prepared.1} parent=1 // pred_fallthru
      _
    %247 = vsyncpa [#allocation3], 1
    %248 = vsyncpa [#allocation5], 1

</llo_original>
